<compile_context>
chip_gen: v7x
topology: tpu7x:2x2x1
jax: 0.10.0
libtpu: 0.0.40
codegen_flags: <defaults>
</compile_context>

<pallas_src>
import functools

import jax
import jax.numpy as jnp
from jax.experimental import pallas as pl
from jax.experimental.pallas import tpu as pltpu

KSIZE = 5
PAD = 2


def _dw5x5_kernel(x_ref, w_ref, o_ref, xp_ref, *, width, base):
    """Depthwise 5x5 conv for one (batch, channel-tile) block.

    x_ref : (1, TC, H*W)       input pixels, spatial flattened on the lane axis
    w_ref : (TC, 25)           per-channel taps, row-major (kh*5 + kw)
    o_ref : (1, TC, H*W)       output block
    xp_ref: (TC, P) VMEM scratch; zero-padded copy of the block.  Pixel (h, w)
            lives at lane index base + h*W + w, with zeros on both sides.
    """
    W = width
    TC = x_ref.shape[1]
    HW = x_ref.shape[2]

    # Build the zero-padded working buffer in VMEM (padding done in-kernel,
    # no extra HBM traffic).  `base` is 128-aligned so the copy-in is an
    # unmasked full-width store when H*W is a multiple of 128.
    xp_ref[...] = jnp.zeros(xp_ref.shape, jnp.float32)
    xp_ref[:, base:base + HW] = x_ref[0].astype(jnp.float32)

    # Weight block loaded once; taps sliced from the in-register value.
    w = w_ref[...].astype(jnp.float32)                       # (TC, 25)

    # Column index of every output lane (for masking the W-boundary wrap).
    col = jax.lax.broadcasted_iota(jnp.int32, (1, HW), 1) % W

    acc = jnp.zeros((TC, HW), jnp.float32)
    for dw in range(-PAD, PAD + 1):
        part = jnp.zeros((TC, HW), jnp.float32)
        for dh in range(-PAD, PAD + 1):
            tap = (dh + PAD) * KSIZE + (dw + PAD)
            off = base + dh * W + dw                         # static lane offset
            v = xp_ref[:, off:off + HW]                      # shifted window
            part = part + v * w[:, tap:tap + 1]              # per-channel tap
        # Lanes whose shifted column fell off the row wrapped into the
        # neighboring row's pixels -> zero them.  (Rows that fall off the
        # image read the zero padding and need no mask.)
        if dw < 0:
            part = jnp.where(col >= -dw, part, 0.0)
        elif dw > 0:
            part = jnp.where(col < W - dw, part, 0.0)
        acc = acc + part

    o_ref[...] = acc[None].astype(o_ref.dtype)


def depthwise_conv5x5_pallas(x_nchw, w_c25, *, tile_c=8):
    """x_nchw: (N, C, H, W); w_c25: (C, 25) depthwise taps. Returns (N, C, H, W)."""
    N, C, H, W = x_nchw.shape
    HW = H * W
    TC = tile_c if C % tile_c == 0 else C

    # Scratch layout: [base zeros | H*W pixels | >=2W+2 zeros], rounded to 128.
    base = ((2 * W + 2 + 127) // 128) * 128
    P = ((base + HW + 2 * W + 2 + 127) // 128) * 128

    x_flat = x_nchw.reshape(N, C, HW)
    kernel = functools.partial(_dw5x5_kernel, width=W, base=base)

    out = pl.pallas_call(
        kernel,
        out_shape=jax.ShapeDtypeStruct((N, C, HW), x_nchw.dtype),
        grid=(N, C // TC),
        in_specs=[
            pl.BlockSpec((1, TC, HW), lambda n, c: (n, c, 0)),
            pl.BlockSpec((TC, KSIZE * KSIZE), lambda n, c: (c, 0)),
        ],
        out_specs=pl.BlockSpec((1, TC, HW), lambda n, c: (n, c, 0)),
        scratch_shapes=[pltpu.VMEM((TC, P), jnp.float32)],
        compiler_params=pltpu.CompilerParams(
            dimension_semantics=("parallel", "parallel")),
    )(x_flat, w_c25)
    return out.reshape(N, C, H, W)


def reparam_5x5_weight(w1x1, w3x3, w5x5, alpha):
    """Fold identity + 1x1 + 3x3 + 5x5 depthwise weights into one 5x5 weight.

    w1x1: (C, 1, 1, 1), w3x3: (C, 1, 3, 3), w5x5: (C, 1, 5, 5), alpha: (4,)
    Returns (C, 1, 5, 5) -- identical semantics to OmniShift.reparam_5x5().
    """
    padded_1x1 = jnp.pad(w1x1, ((0, 0), (0, 0), (2, 2), (2, 2)))
    padded_3x3 = jnp.pad(w3x3, ((0, 0), (0, 0), (1, 1), (1, 1)))
    identity = jnp.pad(jnp.ones_like(w1x1), ((0, 0), (0, 0), (2, 2), (2, 2)))
    return (alpha[0] * identity + alpha[1] * padded_1x1
            + alpha[2] * padded_3x3 + alpha[3] * w5x5)


def omnishift_forward(x_nchw, w1x1, w3x3, w5x5, alpha):
    """Equivalent of OmniShift.forward(x) (repram_flag path)."""
    combined = reparam_5x5_weight(w1x1, w3x3, w5x5, alpha)    # (C, 1, 5, 5)
    C = combined.shape[0]
    w_c25 = combined.reshape(C, KSIZE * KSIZE)                # (C, 25), kh*5+kw
    return depthwise_conv5x5_pallas(x_nchw, w_c25)


def _reference_forward(x_nchw, w1x1, w3x3, w5x5, alpha):
    """Pure-JAX reference (XLA depthwise conv) for correctness checking."""
    combined = reparam_5x5_weight(w1x1, w3x3, w5x5, alpha)    # (C,1,5,5) OIHW
    C = x_nchw.shape[1]
    return jax.lax.conv_general_dilated(
        x_nchw, combined,
        window_strides=(1, 1), padding=((2, 2), (2, 2)),
        dimension_numbers=("NCHW", "OIHW", "NCHW"),
        feature_group_count=C)


if __name__ == "__main__":
    key = jax.random.PRNGKey(0)
    k_x, k_w1, k_w3, k_w5, k_a = jax.random.split(key, 5)

    N, C, H, W = 2, 48, 16, 16  # dim=48 as in the module default
    x = jax.random.normal(k_x, (N, C, H, W), dtype=jnp.float32)

    # Deterministic synthetic parameters (shapes from OmniShift.__init__).
    w1x1 = jax.random.normal(k_w1, (C, 1, 1, 1), dtype=jnp.float32) * 0.1
    w3x3 = jax.random.normal(k_w3, (C, 1, 3, 3), dtype=jnp.float32) * 0.1
    w5x5 = jax.random.normal(k_w5, (C, 1, 5, 5), dtype=jnp.float32) * 0.1
    alpha = jax.random.normal(k_a, (4,), dtype=jnp.float32)

    out = jax.jit(omnishift_forward)(x, w1x1, w3x3, w5x5, alpha)
    out = jax.block_until_ready(out)

    ref = _reference_forward(x, w1x1, w3x3, w5x5, alpha)
    assert out.shape == (N, C, H, W)
    assert jnp.allclose(out, ref, atol=1e-4, rtol=1e-4), "mismatch vs reference"

    print("KERNEL_OK")
</pallas_src>

<mosaic_0001>
module attributes {stable_mosaic.version = 11 : i64} {
  func.func @_dw5x5_kernel(%arg0: i32, %arg1: i32, %arg2: memref<1x8x256xf32, #tpu.memory_space<vmem>>, %arg3: memref<8x25xf32, #tpu.memory_space<vmem>>, %arg4: memref<1x8x256xf32, #tpu.memory_space<vmem>>, %arg5: memref<8x512xf32, #tpu.memory_space<vmem>>) attributes {dimension_semantics = [#tpu.dimension_semantics<parallel>, #tpu.dimension_semantics<parallel>], iteration_bounds = array<i64: 2, 6>, scalar_prefetch = 0 : i64, scratch_operands = 1 : i64, tpu.core_type = #tpu.core_type<tc>, window_params = [{transform_indices = @transform_0, window_bounds = array<i64: 1, 8, 256>}, {transform_indices = @transform_1, window_bounds = array<i64: 8, 25>}, {transform_indices = @transform_2, window_bounds = array<i64: 1, 8, 256>}]} {
    %cst = arith.constant 0.000000e+00 : f32
    %0 = vector.broadcast %cst : f32 to vector<8x512xf32>
    %c0 = arith.constant 0 : index
    %c0_0 = arith.constant 0 : index
    %1 = vector.load %arg5[%c0, %c0_0] : memref<8x512xf32, #tpu.memory_space<vmem>>, vector<8x512xf32>
    tpu.vector_store %arg5[%c0, %c0_0], %0 {strides = array<i32>} : memref<8x512xf32, #tpu.memory_space<vmem>>, vector<8x512xf32>,
    %c0_1 = arith.constant 0 : index
    %c0_2 = arith.constant 0 : index
    %c0_3 = arith.constant 0 : index
    %2 = vector.load %arg2[%c0_1, %c0_2, %c0_3] : memref<1x8x256xf32, #tpu.memory_space<vmem>>, vector<1x8x256xf32>
    %3 = vector.shape_cast %2 : vector<1x8x256xf32> to vector<8x256xf32>
    %c0_4 = arith.constant 0 : index
    %c128 = arith.constant 128 : index
    %4 = vector.load %arg5[%c0_4, %c128] : memref<8x512xf32, #tpu.memory_space<vmem>>, vector<8x256xf32>
    tpu.vector_store %arg5[%c0_4, %c128], %3 {strides = array<i32>} : memref<8x512xf32, #tpu.memory_space<vmem>>, vector<8x256xf32>,
    %c0_5 = arith.constant 0 : index
    %c0_6 = arith.constant 0 : index
    %5 = vector.load %arg3[%c0_5, %c0_6] : memref<8x25xf32, #tpu.memory_space<vmem>>, vector<8x25xf32>
    %6 = tpu.iota {dimensions = array<i32: 1>} : vector<1x256xi32>
    %c16_i32 = arith.constant 16 : i32
    %c0_i32 = arith.constant 0 : i32
    %7 = arith.cmpi eq, %c16_i32, %c0_i32 : i32
    %c1_i32 = arith.constant 1 : i32
    %8 = arith.select %7, %c1_i32, %c16_i32 : i32
    %9 = vector.broadcast %8 : i32 to vector<1x256xi32>
    %10 = arith.remsi %6, %9 : vector<1x256xi32>
    %c0_i32_7 = arith.constant 0 : i32
    %11 = vector.broadcast %c0_i32_7 : i32 to vector<1x256xi32>
    %12 = arith.cmpi ne, %10, %11 : vector<1x256xi32>
    %c0_i32_8 = arith.constant 0 : i32
    %13 = vector.broadcast %c0_i32_8 : i32 to vector<1x256xi32>
    %14 = arith.cmpi slt, %10, %13 : vector<1x256xi32>
    %c0_i32_9 = arith.constant 0 : i32
    %15 = arith.cmpi slt, %8, %c0_i32_9 : i32
    %16 = vector.broadcast %15 : i1 to vector<1x256xi1>
    %17 = vector.broadcast %16 : vector<1x256xi1> to vector<1x256xi1>
    %18 = arith.xori %14, %17 : vector<1x256xi1>
    %19 = arith.andi %18, %12 : vector<1x256xi1>
    %20 = vector.broadcast %8 : i32 to vector<1x256xi32>
    %21 = arith.addi %10, %20 : vector<1x256xi32>
    %22 = arith.select %19, %21, %10 : vector<1x256xi1>, vector<1x256xi32>
    %cst_10 = arith.constant 0.000000e+00 : f32
    %23 = vector.broadcast %cst_10 : f32 to vector<8x256xf32>
    %cst_11 = arith.constant 0.000000e+00 : f32
    %24 = vector.broadcast %cst_11 : f32 to vector<8x256xf32>
    %c0_12 = arith.constant 0 : index
    %c94 = arith.constant 94 : index
    %25 = vector.load %arg5[%c0_12, %c94] : memref<8x512xf32, #tpu.memory_space<vmem>>, vector<8x256xf32>
    %26 = vector.extract_strided_slice %5 {offsets = [0, 0], sizes = [8, 1], strides = [1, 1]} : vector<8x25xf32> to vector<8x1xf32>
    %27 = vector.broadcast %26 : vector<8x1xf32> to vector<8x256xf32>
    %28 = arith.mulf %25, %27 : vector<8x256xf32>
    %29 = arith.addf %24, %28 : vector<8x256xf32>
    %c0_13 = arith.constant 0 : index
    %c110 = arith.constant 110 : index
    %30 = vector.load %arg5[%c0_13, %c110] : memref<8x512xf32, #tpu.memory_space<vmem>>, vector<8x256xf32>
    %31 = vector.extract_strided_slice %5 {offsets = [0, 5], sizes = [8, 1], strides = [1, 1]} : vector<8x25xf32> to vector<8x1xf32>
    %32 = vector.broadcast %31 : vector<8x1xf32> to vector<8x256xf32>
    %33 = arith.mulf %30, %32 : vector<8x256xf32>
    %34 = arith.addf %29, %33 : vector<8x256xf32>
    %c0_14 = arith.constant 0 : index
    %c126 = arith.constant 126 : index
    %35 = vector.load %arg5[%c0_14, %c126] : memref<8x512xf32, #tpu.memory_space<vmem>>, vector<8x256xf32>
    %36 = vector.extract_strided_slice %5 {offsets = [0, 10], sizes = [8, 1], strides = [1, 1]} : vector<8x25xf32> to vector<8x1xf32>
    %37 = vector.broadcast %36 : vector<8x1xf32> to vector<8x256xf32>
    %38 = arith.mulf %35, %37 : vector<8x256xf32>
    %39 = arith.addf %34, %38 : vector<8x256xf32>
    %c0_15 = arith.constant 0 : index
    %c142 = arith.constant 142 : index
    %40 = vector.load %arg5[%c0_15, %c142] : memref<8x512xf32, #tpu.memory_space<vmem>>, vector<8x256xf32>
    %41 = vector.extract_strided_slice %5 {offsets = [0, 15], sizes = [8, 1], strides = [1, 1]} : vector<8x25xf32> to vector<8x1xf32>
    %42 = vector.broadcast %41 : vector<8x1xf32> to vector<8x256xf32>
    %43 = arith.mulf %40, %42 : vector<8x256xf32>
    %44 = arith.addf %39, %43 : vector<8x256xf32>
    %c0_16 = arith.constant 0 : index
    %c158 = arith.constant 158 : index
    %45 = vector.load %arg5[%c0_16, %c158] : memref<8x512xf32, #tpu.memory_space<vmem>>, vector<8x256xf32>
    %46 = vector.extract_strided_slice %5 {offsets = [0, 20], sizes = [8, 1], strides = [1, 1]} : vector<8x25xf32> to vector<8x1xf32>
    %47 = vector.broadcast %46 : vector<8x1xf32> to vector<8x256xf32>
    %48 = arith.mulf %45, %47 : vector<8x256xf32>
    %49 = arith.addf %44, %48 : vector<8x256xf32>
    %c2_i32 = arith.constant 2 : i32
    %50 = vector.broadcast %c2_i32 : i32 to vector<1x256xi32>
    %51 = arith.cmpi sge, %22, %50 : vector<1x256xi32>
    %cst_17 = arith.constant 0.000000e+00 : f32
    %52 = vector.shape_cast %51 : vector<1x256xi1> to vector<1x256xi1>
    %53 = vector.broadcast %52 : vector<1x256xi1> to vector<8x256xi1>
    %54 = vector.broadcast %cst_17 : f32 to vector<8x256xf32>
    %55 = arith.select %53, %49, %54 : vector<8x256xi1>, vector<8x256xf32>
    %56 = arith.addf %23, %55 : vector<8x256xf32>
    %cst_18 = arith.constant 0.000000e+00 : f32
    %57 = vector.broadcast %cst_18 : f32 to vector<8x256xf32>
    %c0_19 = arith.constant 0 : index
    %c95 = arith.constant 95 : index
    %58 = vector.load %arg5[%c0_19, %c95] : memref<8x512xf32, #tpu.memory_space<vmem>>, vector<8x256xf32>
    %59 = vector.extract_strided_slice %5 {offsets = [0, 1], sizes = [8, 1], strides = [1, 1]} : vector<8x25xf32> to vector<8x1xf32>
    %60 = vector.broadcast %59 : vector<8x1xf32> to vector<8x256xf32>
    %61 = arith.mulf %58, %60 : vector<8x256xf32>
    %62 = arith.addf %57, %61 : vector<8x256xf32>
    %c0_20 = arith.constant 0 : index
    %c111 = arith.constant 111 : index
    %63 = vector.load %arg5[%c0_20, %c111] : memref<8x512xf32, #tpu.memory_space<vmem>>, vector<8x256xf32>
    %64 = vector.extract_strided_slice %5 {offsets = [0, 6], sizes = [8, 1], strides = [1, 1]} : vector<8x25xf32> to vector<8x1xf32>
    %65 = vector.broadcast %64 : vector<8x1xf32> to vector<8x256xf32>
    %66 = arith.mulf %63, %65 : vector<8x256xf32>
    %67 = arith.addf %62, %66 : vector<8x256xf32>
    %c0_21 = arith.constant 0 : index
    %c127 = arith.constant 127 : index
    %68 = vector.load %arg5[%c0_21, %c127] : memref<8x512xf32, #tpu.memory_space<vmem>>, vector<8x256xf32>
    %69 = vector.extract_strided_slice %5 {offsets = [0, 11], sizes = [8, 1], strides = [1, 1]} : vector<8x25xf32> to vector<8x1xf32>
    %70 = vector.broadcast %69 : vector<8x1xf32> to vector<8x256xf32>
    %71 = arith.mulf %68, %70 : vector<8x256xf32>
    %72 = arith.addf %67, %71 : vector<8x256xf32>
    %c0_22 = arith.constant 0 : index
    %c143 = arith.constant 143 : index
    %73 = vector.load %arg5[%c0_22, %c143] : memref<8x512xf32, #tpu.memory_space<vmem>>, vector<8x256xf32>
    %74 = vector.extract_strided_slice %5 {offsets = [0, 16], sizes = [8, 1], strides = [1, 1]} : vector<8x25xf32> to vector<8x1xf32>
    %75 = vector.broadcast %74 : vector<8x1xf32> to vector<8x256xf32>
    %76 = arith.mulf %73, %75 : vector<8x256xf32>
    %77 = arith.addf %72, %76 : vector<8x256xf32>
    %c0_23 = arith.constant 0 : index
    %c159 = arith.constant 159 : index
    %78 = vector.load %arg5[%c0_23, %c159] : memref<8x512xf32, #tpu.memory_space<vmem>>, vector<8x256xf32>
    %79 = vector.extract_strided_slice %5 {offsets = [0, 21], sizes = [8, 1], strides = [1, 1]} : vector<8x25xf32> to vector<8x1xf32>
    %80 = vector.broadcast %79 : vector<8x1xf32> to vector<8x256xf32>
    %81 = arith.mulf %78, %80 : vector<8x256xf32>
    %82 = arith.addf %77, %81 : vector<8x256xf32>
    %c1_i32_24 = arith.constant 1 : i32
    %83 = vector.broadcast %c1_i32_24 : i32 to vector<1x256xi32>
    %84 = arith.cmpi sge, %22, %83 : vector<1x256xi32>
    %cst_25 = arith.constant 0.000000e+00 : f32
    %85 = vector.shape_cast %84 : vector<1x256xi1> to vector<1x256xi1>
    %86 = vector.broadcast %85 : vector<1x256xi1> to vector<8x256xi1>
    %87 = vector.broadcast %cst_25 : f32 to vector<8x256xf32>
    %88 = arith.select %86, %82, %87 : vector<8x256xi1>, vector<8x256xf32>
    %89 = arith.addf %56, %88 : vector<8x256xf32>
    %cst_26 = arith.constant 0.000000e+00 : f32
    %90 = vector.broadcast %cst_26 : f32 to vector<8x256xf32>
    %c0_27 = arith.constant 0 : index
    %c96 = arith.constant 96 : index
    %91 = vector.load %arg5[%c0_27, %c96] : memref<8x512xf32, #tpu.memory_space<vmem>>, vector<8x256xf32>
    %92 = vector.extract_strided_slice %5 {offsets = [0, 2], sizes = [8, 1], strides = [1, 1]} : vector<8x25xf32> to vector<8x1xf32>
    %93 = vector.broadcast %92 : vector<8x1xf32> to vector<8x256xf32>
    %94 = arith.mulf %91, %93 : vector<8x256xf32>
    %95 = arith.addf %90, %94 : vector<8x256xf32>
    %c0_28 = arith.constant 0 : index
    %c112 = arith.constant 112 : index
    %96 = vector.load %arg5[%c0_28, %c112] : memref<8x512xf32, #tpu.memory_space<vmem>>, vector<8x256xf32>
    %97 = vector.extract_strided_slice %5 {offsets = [0, 7], sizes = [8, 1], strides = [1, 1]} : vector<8x25xf32> to vector<8x1xf32>
    %98 = vector.broadcast %97 : vector<8x1xf32> to vector<8x256xf32>
    %99 = arith.mulf %96, %98 : vector<8x256xf32>
    %100 = arith.addf %95, %99 : vector<8x256xf32>
    %c0_29 = arith.constant 0 : index
    %c128_30 = arith.constant 128 : index
    %101 = vector.load %arg5[%c0_29, %c128_30] : memref<8x512xf32, #tpu.memory_space<vmem>>, vector<8x256xf32>
    %102 = vector.extract_strided_slice %5 {offsets = [0, 12], sizes = [8, 1], strides = [1, 1]} : vector<8x25xf32> to vector<8x1xf32>
    %103 = vector.broadcast %102 : vector<8x1xf32> to vector<8x256xf32>
    %104 = arith.mulf %101, %103 : vector<8x256xf32>
    %105 = arith.addf %100, %104 : vector<8x256xf32>
    %c0_31 = arith.constant 0 : index
    %c144 = arith.constant 144 : index
    %106 = vector.load %arg5[%c0_31, %c144] : memref<8x512xf32, #tpu.memory_space<vmem>>, vector<8x256xf32>
    %107 = vector.extract_strided_slice %5 {offsets = [0, 17], sizes = [8, 1], strides = [1, 1]} : vector<8x25xf32> to vector<8x1xf32>
    %108 = vector.broadcast %107 : vector<8x1xf32> to vector<8x256xf32>
    %109 = arith.mulf %106, %108 : vector<8x256xf32>
    %110 = arith.addf %105, %109 : vector<8x256xf32>
    %c0_32 = arith.constant 0 : index
    %c160 = arith.constant 160 : index
    %111 = vector.load %arg5[%c0_32, %c160] : memref<8x512xf32, #tpu.memory_space<vmem>>, vector<8x256xf32>
    %112 = vector.extract_strided_slice %5 {offsets = [0, 22], sizes = [8, 1], strides = [1, 1]} : vector<8x25xf32> to vector<8x1xf32>
    %113 = vector.broadcast %112 : vector<8x1xf32> to vector<8x256xf32>
    %114 = arith.mulf %111, %113 : vector<8x256xf32>
    %115 = arith.addf %110, %114 : vector<8x256xf32>
    %116 = arith.addf %89, %115 : vector<8x256xf32>
    %cst_33 = arith.constant 0.000000e+00 : f32
    %117 = vector.broadcast %cst_33 : f32 to vector<8x256xf32>
    %c0_34 = arith.constant 0 : index
    %c97 = arith.constant 97 : index
    %118 = vector.load %arg5[%c0_34, %c97] : memref<8x512xf32, #tpu.memory_space<vmem>>, vector<8x256xf32>
    %119 = vector.extract_strided_slice %5 {offsets = [0, 3], sizes = [8, 1], strides = [1, 1]} : vector<8x25xf32> to vector<8x1xf32>
    %120 = vector.broadcast %119 : vector<8x1xf32> to vector<8x256xf32>
    %121 = arith.mulf %118, %120 : vector<8x256xf32>
    %122 = arith.addf %117, %121 : vector<8x256xf32>
    %c0_35 = arith.constant 0 : index
    %c113 = arith.constant 113 : index
    %123 = vector.load %arg5[%c0_35, %c113] : memref<8x512xf32, #tpu.memory_space<vmem>>, vector<8x256xf32>
    %124 = vector.extract_strided_slice %5 {offsets = [0, 8], sizes = [8, 1], strides = [1, 1]} : vector<8x25xf32> to vector<8x1xf32>
    %125 = vector.broadcast %124 : vector<8x1xf32> to vector<8x256xf32>
    %126 = arith.mulf %123, %125 : vector<8x256xf32>
    %127 = arith.addf %122, %126 : vector<8x256xf32>
    %c0_36 = arith.constant 0 : index
    %c129 = arith.constant 129 : index
    %128 = vector.load %arg5[%c0_36, %c129] : memref<8x512xf32, #tpu.memory_space<vmem>>, vector<8x256xf32>
    %129 = vector.extract_strided_slice %5 {offsets = [0, 13], sizes = [8, 1], strides = [1, 1]} : vector<8x25xf32> to vector<8x1xf32>
    %130 = vector.broadcast %129 : vector<8x1xf32> to vector<8x256xf32>
    %131 = arith.mulf %128, %130 : vector<8x256xf32>
    %132 = arith.addf %127, %131 : vector<8x256xf32>
    %c0_37 = arith.constant 0 : index
    %c145 = arith.constant 145 : index
    %133 = vector.load %arg5[%c0_37, %c145] : memref<8x512xf32, #tpu.memory_space<vmem>>, vector<8x256xf32>
    %134 = vector.extract_strided_slice %5 {offsets = [0, 18], sizes = [8, 1], strides = [1, 1]} : vector<8x25xf32> to vector<8x1xf32>
    %135 = vector.broadcast %134 : vector<8x1xf32> to vector<8x256xf32>
    %136 = arith.mulf %133, %135 : vector<8x256xf32>
    %137 = arith.addf %132, %136 : vector<8x256xf32>
    %c0_38 = arith.constant 0 : index
    %c161 = arith.constant 161 : index
    %138 = vector.load %arg5[%c0_38, %c161] : memref<8x512xf32, #tpu.memory_space<vmem>>, vector<8x256xf32>
    %139 = vector.extract_strided_slice %5 {offsets = [0, 23], sizes = [8, 1], strides = [1, 1]} : vector<8x25xf32> to vector<8x1xf32>
    %140 = vector.broadcast %139 : vector<8x1xf32> to vector<8x256xf32>
    %141 = arith.mulf %138, %140 : vector<8x256xf32>
    %142 = arith.addf %137, %141 : vector<8x256xf32>
    %c15_i32 = arith.constant 15 : i32
    %143 = vector.broadcast %c15_i32 : i32 to vector<1x256xi32>
    %144 = arith.cmpi slt, %22, %143 : vector<1x256xi32>
    %cst_39 = arith.constant 0.000000e+00 : f32
    %145 = vector.shape_cast %144 : vector<1x256xi1> to vector<1x256xi1>
    %146 = vector.broadcast %145 : vector<1x256xi1> to vector<8x256xi1>
    %147 = vector.broadcast %cst_39 : f32 to vector<8x256xf32>
    %148 = arith.select %146, %142, %147 : vector<8x256xi1>, vector<8x256xf32>
    %149 = arith.addf %116, %148 : vector<8x256xf32>
    %cst_40 = arith.constant 0.000000e+00 : f32
    %150 = vector.broadcast %cst_40 : f32 to vector<8x256xf32>
    %c0_41 = arith.constant 0 : index
    %c98 = arith.constant 98 : index
    %151 = vector.load %arg5[%c0_41, %c98] : memref<8x512xf32, #tpu.memory_space<vmem>>, vector<8x256xf32>
    %152 = vector.extract_strided_slice %5 {offsets = [0, 4], sizes = [8, 1], strides = [1, 1]} : vector<8x25xf32> to vector<8x1xf32>
    %153 = vector.broadcast %152 : vector<8x1xf32> to vector<8x256xf32>
    %154 = arith.mulf %151, %153 : vector<8x256xf32>
    %155 = arith.addf %150, %154 : vector<8x256xf32>
    %c0_42 = arith.constant 0 : index
    %c114 = arith.constant 114 : index
    %156 = vector.load %arg5[%c0_42, %c114] : memref<8x512xf32, #tpu.memory_space<vmem>>, vector<8x256xf32>
    %157 = vector.extract_strided_slice %5 {offsets = [0, 9], sizes = [8, 1], strides = [1, 1]} : vector<8x25xf32> to vector<8x1xf32>
    %158 = vector.broadcast %157 : vector<8x1xf32> to vector<8x256xf32>
    %159 = arith.mulf %156, %158 : vector<8x256xf32>
    %160 = arith.addf %155, %159 : vector<8x256xf32>
    %c0_43 = arith.constant 0 : index
    %c130 = arith.constant 130 : index
    %161 = vector.load %arg5[%c0_43, %c130] : memref<8x512xf32, #tpu.memory_space<vmem>>, vector<8x256xf32>
    %162 = vector.extract_strided_slice %5 {offsets = [0, 14], sizes = [8, 1], strides = [1, 1]} : vector<8x25xf32> to vector<8x1xf32>
    %163 = vector.broadcast %162 : vector<8x1xf32> to vector<8x256xf32>
    %164 = arith.mulf %161, %163 : vector<8x256xf32>
    %165 = arith.addf %160, %164 : vector<8x256xf32>
    %c0_44 = arith.constant 0 : index
    %c146 = arith.constant 146 : index
    %166 = vector.load %arg5[%c0_44, %c146] : memref<8x512xf32, #tpu.memory_space<vmem>>, vector<8x256xf32>
    %167 = vector.extract_strided_slice %5 {offsets = [0, 19], sizes = [8, 1], strides = [1, 1]} : vector<8x25xf32> to vector<8x1xf32>
    %168 = vector.broadcast %167 : vector<8x1xf32> to vector<8x256xf32>
    %169 = arith.mulf %166, %168 : vector<8x256xf32>
    %170 = arith.addf %165, %169 : vector<8x256xf32>
    %c0_45 = arith.constant 0 : index
    %c162 = arith.constant 162 : index
    %171 = vector.load %arg5[%c0_45, %c162] : memref<8x512xf32, #tpu.memory_space<vmem>>, vector<8x256xf32>
    %172 = vector.extract_strided_slice %5 {offsets = [0, 24], sizes = [8, 1], strides = [1, 1]} : vector<8x25xf32> to vector<8x1xf32>
    %173 = vector.broadcast %172 : vector<8x1xf32> to vector<8x256xf32>
    %174 = arith.mulf %171, %173 : vector<8x256xf32>
    %175 = arith.addf %170, %174 : vector<8x256xf32>
    %c14_i32 = arith.constant 14 : i32
    %176 = vector.broadcast %c14_i32 : i32 to vector<1x256xi32>
    %177 = arith.cmpi slt, %22, %176 : vector<1x256xi32>
    %cst_46 = arith.constant 0.000000e+00 : f32
    %178 = vector.shape_cast %177 : vector<1x256xi1> to vector<1x256xi1>
    %179 = vector.broadcast %178 : vector<1x256xi1> to vector<8x256xi1>
    %180 = vector.broadcast %cst_46 : f32 to vector<8x256xf32>
    %181 = arith.select %179, %175, %180 : vector<8x256xi1>, vector<8x256xf32>
    %182 = arith.addf %149, %181 : vector<8x256xf32>
    %183 = vector.shape_cast %182 : vector<8x256xf32> to vector<1x8x256xf32>
    %c0_47 = arith.constant 0 : index
    %c0_48 = arith.constant 0 : index
    %c0_49 = arith.constant 0 : index
    %184 = vector.load %arg4[%c0_47, %c0_48, %c0_49] : memref<1x8x256xf32, #tpu.memory_space<vmem>>, vector<1x8x256xf32>
    tpu.vector_store %arg4[%c0_47, %c0_48, %c0_49], %183 {strides = array<i32>} : memref<1x8x256xf32, #tpu.memory_space<vmem>>, vector<1x8x256xf32>,
    return
  }
  func.func @transform_0(%arg0: i32, %arg1: i32) -> (i32, i32, i32) {
    %c0_i32 = arith.constant 0 : i32
    %c0_i32_0 = arith.constant 0 : i32
    return %arg0, %arg1, %c0_i32 : i32, i32, i32
  }
  func.func @transform_1(%arg0: i32, %arg1: i32) -> (i32, i32) {
    %c0_i32 = arith.constant 0 : i32
    %c0_i32_0 = arith.constant 0 : i32
    return %arg1, %c0_i32 : i32, i32
  }
  func.func @transform_2(%arg0: i32, %arg1: i32) -> (i32, i32, i32) {
    %c0_i32 = arith.constant 0 : i32
    %c0_i32_0 = arith.constant 0 : i32
    return %arg0, %arg1, %c0_i32 : i32, i32, i32
  }
}

</mosaic_0001>

<llo_original>
// kernel: omnishift_forward.1
$region0: #{omnishift_forward.1}
  #allocation0 [shape = 'u32[]', space=smem, size = 0x4, offset = 0x4, fixed_abs, tag = 'smem constant byte address 0x4 - core index']
  #allocation1 [shape = 'u32[144,128]{1,0:T(1,128)}', space=vmem, size = 0x12000, scoped, tag = 'internal scratch']
  #allocation2 [shape = 'f32[8,512]{1,0:T(8,128)}', space=vmem, size = 0x4000, scoped, tag = 'scratch operand']
  %s0 = inlined_call_operand.vmem [shape: f32[2,48,256], index: 0, kind: input, shape index: {}]
  %s1 = inlined_call_operand.vmem [shape: f32[48,25], index: 1, kind: input, shape index: {}]
  %s2 = inlined_call_operand.vmem [shape: f32[2,48,256], index: 2, kind: output, shape index: {}]
  %s3 = sld [smem:[#allocation0]]
  $region41: #{omnishift_forward.1} parent=0
    _
  %s5 = ssub.s32 1, %s3
  %s6 = scalar_select 0, %s5, %s3
  loop: start=0, step=1, limit=14
  $region2: #{omnishift_forward.1} parent=0 // loop_pre_header
    _
  $region3: #{omnishift_forward.1} parent=0 // loop_header
    %s8 = sphi 0, %s12
    %p9 = scmp.ge.s32.totalorder %s8, 14
    %s15 = sphi 0, %s27
    %s16 = sphi 0, %s23
    %s17 = sphi 0, %s15
    %s18 = sphi 0, %s16
    %s19 = sphi 0, %s17
    %s20 = sphi 0, %s18
    %s32 = sphi 0, %s34
    %s35 = sphi 0, %s32
    %s36 = sphi 0, %s35
    %s52 = sphi 0, %s36
    %s58 = sphi 0, %s60
    %s61 = sphi 0, %s58
    %s62 = sphi 0, %s61
    %s78 = sphi 0, %s62
    %s86 = sphi 0, %s88
    %s89 = sphi 0, %s86
    %s90 = sphi 0, %s89
    %s106 = sphi 0, %s90
  $region4: #{omnishift_forward.1} parent=0 // loop_header_branch
    %11 = sbr.rel (%p9) target = $region8
  $region5: #{omnishift_forward.1} parent=0 // loop_body
    %s13 = ssub.s32 %s8, 1
    %s14 = ssub.s32 %s8, 2
    %s21 = sadd.s32 1, %s16
    %p22 = scmp.ge.s32.totalorder %s21, 6
    %s23 = scalar_select %p22, 0, %s21
    %s24 = sadd.s32 1, %s15
    %s25 = scalar_select %p22, %s24, %s15
    %p26 = scmp.ge.s32.totalorder %s25, 2
    %s27 = scalar_select %p26, 0, %s25
    %s28 = ssub.s32 %s15, %s27
    %s29 = ssub.s32 %s16, %s23
    %s30 = sor.u32 %s28, %s29
    %p31 = scmp.eq.s32.totalorder %s30, 0
    %s33 = sadd.s32 %s32, 1
    %s34 = scalar_select %p31, %s32, %s33
    %p37 = pneg %p31
    %p38 = scmp.eq.s32.totalorder %s8, 11
    %p39 = por %p37, %p38
    %p40 = scmp.ne.s32.totalorder %s32, %s35
    %p41 = scmp.eq.s32.totalorder %s8, 0
    %p42 = por %p40, %p41
    %p43 = scmp.ne.s32.totalorder %s32, %s35
    %p44 = scmp.eq.s32.totalorder %s13, 11
    %p45 = por %p43, %p44
    %p46 = scmp.ne.s32.totalorder %s35, %s36
    %p47 = scmp.eq.s32.totalorder %s13, 0
    %p48 = por %p46, %p47
    %p49 = scmp.ne.s32.totalorder %s35, %s36
    %p50 = scmp.eq.s32.totalorder %s14, 11
    %p51 = por %p49, %p50
    %p53 = scmp.ne.s32.totalorder %s36, %s52
    %p54 = scmp.eq.s32.totalorder %s14, 0
    %p55 = por %p53, %p54
    %s56 = ssub.s32 %s16, %s23
    %p57 = scmp.eq.s32.totalorder %s56, 0
    %s59 = sadd.s32 %s58, 1
    %s60 = scalar_select %p57, %s58, %s59
    %p63 = pneg %p57
    %p64 = scmp.eq.s32.totalorder %s8, 11
    %p65 = por %p63, %p64
    %p66 = scmp.ne.s32.totalorder %s58, %s61
    %p67 = scmp.eq.s32.totalorder %s8, 0
    %p68 = por %p66, %p67
    %p69 = scmp.ne.s32.totalorder %s58, %s61
    %p70 = scmp.eq.s32.totalorder %s13, 11
    %p71 = por %p69, %p70
    %p72 = scmp.ne.s32.totalorder %s61, %s62
    %p73 = scmp.eq.s32.totalorder %s13, 0
    %p74 = por %p72, %p73
    %p75 = scmp.ne.s32.totalorder %s61, %s62
    %p76 = scmp.eq.s32.totalorder %s14, 11
    %p77 = por %p75, %p76
    %p79 = scmp.ne.s32.totalorder %s62, %s78
    %p80 = scmp.eq.s32.totalorder %s14, 0
    %p81 = por %p79, %p80
    %s82 = ssub.s32 %s15, %s27
    %s83 = ssub.s32 %s16, %s23
    %s84 = sor.u32 %s82, %s83
    %p85 = scmp.eq.s32.totalorder %s84, 0
    %s87 = sadd.s32 %s86, 1
    %s88 = scalar_select %p85, %s86, %s87
    %p91 = pneg %p85
    %p92 = scmp.eq.s32.totalorder %s8, 11
    %p93 = por %p91, %p92
    %p94 = scmp.ne.s32.totalorder %s86, %s89
    %p95 = scmp.eq.s32.totalorder %s8, 0
    %p96 = por %p94, %p95
    %p97 = scmp.ne.s32.totalorder %s86, %s89
    %p98 = scmp.eq.s32.totalorder %s13, 11
    %p99 = por %p97, %p98
    %p100 = scmp.ne.s32.totalorder %s89, %s90
    %p101 = scmp.eq.s32.totalorder %s13, 0
    %p102 = por %p100, %p101
    %p103 = scmp.ne.s32.totalorder %s89, %s90
    %p104 = scmp.eq.s32.totalorder %s14, 11
    %p105 = por %p103, %p104
    %p107 = scmp.ne.s32.totalorder %s90, %s106
    %p108 = scmp.eq.s32.totalorder %s14, 0
    %p109 = por %p107, %p108
    %p110 = scmp.le.s32.totalorder 1, %s8
    %p111 = scmp.lt.s32.totalorder %s8, 13
    %p112 = pnand %p110, %p111
    %p113 = pneg %p112
    // Predicated region
    $region9: #{omnishift_forward.1} parent=5 // pred_check
      _
    $region10: #{omnishift_forward.1} parent=5 // pred_check_branch
      %115 = sbr.rel (%p112) target = $region12
    $region11: #{omnishift_forward.1} parent=5 // pred_region
      %s116 = ssub.s32 %s8, 1
    $region12: #{omnishift_forward.1} parent=5 // pred_fallthru
      _
    %p117 = scmp.lt.s32.totalorder %s8, 12
    // Predicated region
    $region13: #{omnishift_forward.1} parent=5 // pred_check
      %p118 = pneg %p117
    $region14: #{omnishift_forward.1} parent=5 // pred_check_branch
      %120 = sbr.rel (%p118) target = $region16
    $region15: #{omnishift_forward.1} parent=5 // pred_region
      // Predicated region
      $region17: #{omnishift_forward.1} parent=15 // pred_check
        %p121 = pneg %p42
      $region18: #{omnishift_forward.1} parent=15 // pred_check_branch
        %123 = sbr.rel (%p121) target = $region20
      $region19: #{omnishift_forward.1} parent=15 // pred_region
        %p124 = scmp.lt.s32.totalorder %s15, 1
        %s125 = scalar_select %p124, %s15, 1
        %p126 = scmp.lt.s32.totalorder %s16, 5
        %s127 = scalar_select %p126, %s16, 5
        %s128 = smul.addr %s127, 2
        %s129 = smul.addr %s125, 12
        %s130 = sadd.s32 %s128, %s129
        %s131 = smul.addr %s130, 8
        %s132 = scalar_lea.vmem %s0, %s131
      $region20: #{omnishift_forward.1} parent=15 // pred_fallthru
        _
      // Predicated region
      $region21: #{omnishift_forward.1} parent=15 // pred_check
        %p133 = pneg %p68
      $region22: #{omnishift_forward.1} parent=15 // pred_check_branch
        %135 = sbr.rel (%p133) target = $region24
      $region23: #{omnishift_forward.1} parent=15 // pred_region
        %p136 = scmp.lt.s32.totalorder %s16, 5
        %s137 = scalar_select %p136, %s16, 5
        %s138 = smul.addr %s137, 8
        %s139 = scalar_lea.vmem %s1, %s138
      $region24: #{omnishift_forward.1} parent=15 // pred_fallthru
        _
    $region16: #{omnishift_forward.1} parent=5 // pred_fallthru
      _
    %p140 = scmp.le.s32.totalorder 1, %s8
    %p141 = scmp.lt.s32.totalorder %s8, 13
    %p142 = pnand %p140, %p141
    %p143 = pneg %p142
    // Predicated region
    $region25: #{omnishift_forward.1} parent=5 // pred_check
      _
    $region26: #{omnishift_forward.1} parent=5 // pred_check_branch
      %145 = sbr.rel (%p142) target = $region28
    $region27: #{omnishift_forward.1} parent=5 // pred_region
      %s146 = ssub.s32 %s8, 1
      %p147 = scmp.lt.s32.totalorder %s17, 1
      %s148 = scalar_select %p147, %s17, 1
      %p149 = scmp.lt.s32.totalorder %s18, 5
      %s150 = scalar_select %p149, %s18, 5
      %s151 = smul.addr %s150, 2
      %s152 = smul.addr %s148, 12
      %s153 = sadd.s32 %s151, %s152
      %s154 = smul.addr %s153, 8
      %s155 = scalar_lea.vmem %s0, %s154
      %p156 = pneg %p48
      %p157 = pneg %p45
      %p158 = scmp.lt.s32.totalorder %s18, 5
      %s159 = scalar_select %p158, %s18, 5
      %s160 = smul.addr %s159, 8
      %s161 = scalar_lea.vmem %s1, %s160
      %p162 = pneg %p74
      %p163 = pneg %p71
      %p164 = pneg %p102
      %p165 = pneg %p99
      %p166 = scmp.lt.s32.totalorder %s17, 1
      %s167 = scalar_select %p166, %s17, 1
      %p168 = scmp.lt.s32.totalorder %s18, 5
      %s169 = scalar_select %p168, %s18, 5
      %s170 = smul.addr %s169, 2
      %s171 = smul.addr %s167, 12
      %s172 = sadd.s32 %s170, %s171
      %s173 = smul.addr %s172, 8
      %s174 = scalar_lea.vmem %s2, %s173
      %p175 = scmp.lt.s32.totalorder %s17, 1
      %s176 = scalar_select %p175, %s17, 1
      %p177 = scmp.lt.s32.totalorder %s18, 5
      %s178 = scalar_select %p177, %s18, 5
      %s179 = smul.addr %s178, 2
      %s180 = smul.addr %s176, 12
      %s181 = sadd.s32 %s179, %s180
      %s182 = smul.addr %s181, 8
      %s183 = scalar_lea.vmem %s0, %s182
      %p184 = scmp.lt.s32.totalorder %s18, 5
      %s185 = scalar_select %p184, %s18, 5
      %s186 = smul.addr %s185, 8
      %s187 = scalar_lea.vmem %s1, %s186
      %p188 = scmp.lt.s32.totalorder %s17, 1
      %s189 = scalar_select %p188, %s17, 1
      %p190 = scmp.lt.s32.totalorder %s18, 5
      %s191 = scalar_select %p190, %s18, 5
      %s192 = smul.addr %s191, 2
      %s193 = smul.addr %s189, 12
      %s194 = sadd.s32 %s192, %s193
      %s195 = smul.addr %s194, 8
      %s196 = scalar_lea.vmem %s2, %s195
      %197 = vst [vmem:[#allocation2] sm:$0xff] 0.0
      %198 = vst [vmem:[#allocation2 + $0x8] sm:$0xff] 0.0
      %199 = vst [vmem:[#allocation2 + $0x10] sm:$0xff] 0.0
      %200 = vst [vmem:[#allocation2 + $0x18] sm:$0xff] 0.0
      %v201 = vld [vmem:[%s183] sm:$0xff]
      %v202 = vld [vmem:[%s183 + $0x8] sm:$0xff]
      %203 = vst [vmem:[#allocation2 + $0x8] sm:$0xff] %v201
      %204 = vst [vmem:[#allocation2 + $0x10] sm:$0xff] %v202
      %v205 = vld [vmem:[%s187] sm:$0xff]
      %v206 = vlaneseq
      %v207 = vand.u32 %v206, 127
      %v208 = vadd.s32 %v207, 128
      %vm209 = vcmp.lt.s32.totalorder %v207, 0
      %v210 = vsub.s32 0, %v207
      %v211 = vsel %vm209, %v210, %v207
      %v212 = vshrl.u32 %v211, 4
      %v213 = vand.u32 %v211, 15
      %v214 = vsub.s32 0, %v213
      %v215 = vsel %vm209, %v214, %v213
      %vm216 = vcmp.lt.s32.totalorder %v208, 0
      %v217 = vsub.s32 0, %v208
      %v218 = vsel %vm216, %v217, %v208
      %v219 = vshrl.u32 %v218, 4
      %v220 = vand.u32 %v218, 15
      %v221 = vsub.s32 0, %v220
      %v222 = vsel %vm216, %v221, %v220
      %vm223 = vcmp.ne.s32.totalorder %v215, 0
      %vm224 = vcmp.ne.s32.totalorder %v222, 0
      %vm225 = vcmp.lt.s32.totalorder %v215, 0
      %vm226 = vcmp.lt.s32.totalorder %v222, 0
      %vm227 = vmand %vm225, %vm223
      %vm228 = vmand %vm226, %vm224
      %v229 = vadd.s32 %v215, 16
      %v230 = vadd.s32 %v222, 16
      %v231 = vsel %vm227, %v229, %v215
      %v232 = vsel %vm228, %v230, %v222
      %v233 = vld [vmem:[#allocation2] sm:$0xff]
      %v234 = vld [vmem:[#allocation2 + $0x8] sm:$0xff]
      %v235 = vld [vmem:[#allocation2 + $0x10] sm:$0xff]
      %237 = vset.pattern.permute.xlu0 0
      %238 = vperm.xlu0 %237, %v205
      %v239 = vpop.permute.xlu0 %238
      %v241 = vmul.f32 %v233, %v239
      %v242 = vmul.f32 %v234, %v239
      %v243 = vmul.f32 %v235, %v239
      %v244 = vadd.f32 %v241, 0.0
      %v245 = vadd.f32 %v242, 0.0
      %v246 = vadd.f32 %v243, 0.0
      %247 = vset.pattern.permute.xlu0 5
      %248 = vperm.xlu0 %247, %v205
      %v249 = vpop.permute.xlu0 %248
      %v251 = vmul.f32 %v233, %v249
      %v252 = vmul.f32 %v234, %v249
      %v253 = vmul.f32 %v235, %v249
      %257 = vrot.lane.b32.xlu0 %v251, 112
      %v258 = vpop.permute.xlu0 %257
      %259 = vrot.lane.b32.xlu0 %v252, 112
      %v260 = vpop.permute.xlu0 %259
      %261 = vrot.lane.b32.xlu0 %v253, 112
      %v262 = vpop.permute.xlu0 %261
      %vm263 = vcmask 916480
      %v264 = vsel %vm263, %v258, %v260
      %v265 = vsel %vm263, %v260, %v262
      %v269 = vadd.f32 %v244, %v264
      %v270 = vadd.f32 %v245, %v265
      %v271 = vadd.f32 %v246, %v262
      %272 = vset.pattern.permute.xlu0 10
      %273 = vperm.xlu0 %272, %v205
      %v274 = vpop.permute.xlu0 %273
      %v276 = vmul.f32 %v233, %v274
      %v277 = vmul.f32 %v234, %v274
      %v278 = vmul.f32 %v235, %v274
      %282 = vrot.lane.b32.xlu0 %v276, 96
      %v283 = vpop.permute.xlu0 %282
      %284 = vrot.lane.b32.xlu0 %v277, 96
      %v285 = vpop.permute.xlu0 %284
      %286 = vrot.lane.b32.xlu0 %v278, 96
      %v287 = vpop.permute.xlu0 %286
      %vm288 = vcmask 785408
      %v289 = vsel %vm288, %v283, %v285
      %v290 = vsel %vm288, %v285, %v287
      %v294 = vadd.f32 %v269, %v289
      %v295 = vadd.f32 %v270, %v290
      %v296 = vadd.f32 %v271, %v287
      %v297 = vld [vmem:[#allocation2 + $0x8] sm:$0xff]
      %v298 = vld [vmem:[#allocation2 + $0x10] sm:$0xff]
      %v299 = vld [vmem:[#allocation2 + $0x18] sm:$0xff]
      %300 = vset.pattern.permute.xlu0 15
      %301 = vperm.xlu0 %300, %v205
      %v302 = vpop.permute.xlu0 %301
      %v304 = vmul.f32 %v297, %v302
      %v305 = vmul.f32 %v298, %v302
      %v306 = vmul.f32 %v299, %v302
      %310 = vrot.lane.b32.xlu0 %v304, 80
      %v311 = vpop.permute.xlu0 %310
      %312 = vrot.lane.b32.xlu0 %v305, 80
      %v313 = vpop.permute.xlu0 %312
      %314 = vrot.lane.b32.xlu0 %v306, 80
      %v315 = vpop.permute.xlu0 %314
      %vm316 = vcmask 654336
      %v317 = vsel %vm316, %v311, %v313
      %v318 = vsel %vm316, %v313, %v315
      %v322 = vadd.f32 %v294, %v311
      %v323 = vadd.f32 %v295, %v317
      %v324 = vadd.f32 %v296, %v318
      %325 = vset.pattern.permute.xlu0 20
      %326 = vperm.xlu0 %325, %v205
      %v327 = vpop.permute.xlu0 %326
      %v329 = vmul.f32 %v297, %v327
      %v330 = vmul.f32 %v298, %v327
      %v331 = vmul.f32 %v299, %v327
      %335 = vrot.lane.b32.xlu0 %v329, 64
      %v336 = vpop.permute.xlu0 %335
      %337 = vrot.lane.b32.xlu0 %v330, 64
      %v338 = vpop.permute.xlu0 %337
      %339 = vrot.lane.b32.xlu0 %v331, 64
      %v340 = vpop.permute.xlu0 %339
      %vm341 = vcmask 523264
      %v342 = vsel %vm341, %v336, %v338
      %v343 = vsel %vm341, %v338, %v340
      %v347 = vadd.f32 %v322, %v336
      %v348 = vadd.f32 %v323, %v342
      %v349 = vadd.f32 %v324, %v343
      %vm350 = vcmp.ge.s32.totalorder %v231, 2
      %vm351 = vcmp.ge.s32.totalorder %v232, 2
      %v352 = vsel %vm350, 1, 0
      %v353 = vsel %vm351, 1, 0
      %vm354 = vcmp.eq.s32.totalorder %v352, 1
      %vm355 = vcmp.eq.s32.totalorder %v353, 1
      %359 = vrot.lane.b32.xlu0 %v347, 34
      %v360 = vpop.permute.xlu0 %359
      %361 = vrot.lane.b32.xlu0 %v348, 34
      %v362 = vpop.permute.xlu0 %361
      %363 = vrot.lane.b32.xlu0 %v349, 34
      %v364 = vpop.permute.xlu0 %363
      %vm365 = vcmask 277504
      %v366 = vsel %vm365, %v360, %v362
      %v367 = vsel %vm365, %v362, %v364
      %v370 = vsel %vm354, %v366, 0.0
      %v371 = vsel %vm355, %v367, 0.0
      %v372 = vadd.f32 %v370, 0.0
      %v373 = vadd.f32 %v371, 0.0
      %374 = vset.pattern.permute.xlu0 1
      %375 = vperm.xlu0 %374, %v205
      %v376 = vpop.permute.xlu0 %375
      %v378 = vmul.f32 %v233, %v376
      %v379 = vmul.f32 %v234, %v376
      %v380 = vmul.f32 %v235, %v376
      %v381 = vadd.f32 %v378, 0.0
      %v382 = vadd.f32 %v379, 0.0
      %v383 = vadd.f32 %v380, 0.0
      %384 = vset.pattern.permute.xlu0 6
      %385 = vperm.xlu0 %384, %v205
      %v386 = vpop.permute.xlu0 %385
      %v388 = vmul.f32 %v233, %v386
      %v389 = vmul.f32 %v234, %v386
      %v390 = vmul.f32 %v235, %v386
      %394 = vrot.lane.b32.xlu0 %v388, 112
      %v395 = vpop.permute.xlu0 %394
      %396 = vrot.lane.b32.xlu0 %v389, 112
      %v397 = vpop.permute.xlu0 %396
      %398 = vrot.lane.b32.xlu0 %v390, 112
      %v399 = vpop.permute.xlu0 %398
      %v400 = vsel %vm263, %v395, %v397
      %v401 = vsel %vm263, %v397, %v399
      %v405 = vadd.f32 %v381, %v400
      %v406 = vadd.f32 %v382, %v401
      %v407 = vadd.f32 %v383, %v399
      %408 = vset.pattern.permute.xlu0 11
      %409 = vperm.xlu0 %408, %v205
      %v410 = vpop.permute.xlu0 %409
      %v412 = vmul.f32 %v233, %v410
      %v413 = vmul.f32 %v234, %v410
      %v414 = vmul.f32 %v235, %v410
      %418 = vrot.lane.b32.xlu0 %v412, 96
      %v419 = vpop.permute.xlu0 %418
      %420 = vrot.lane.b32.xlu0 %v413, 96
      %v421 = vpop.permute.xlu0 %420
      %422 = vrot.lane.b32.xlu0 %v414, 96
      %v423 = vpop.permute.xlu0 %422
      %v424 = vsel %vm288, %v419, %v421
      %v425 = vsel %vm288, %v421, %v423
      %v429 = vadd.f32 %v405, %v424
      %v430 = vadd.f32 %v406, %v425
      %v431 = vadd.f32 %v407, %v423
      %432 = vset.pattern.permute.xlu0 16
      %433 = vperm.xlu0 %432, %v205
      %v434 = vpop.permute.xlu0 %433
      %v436 = vmul.f32 %v297, %v434
      %v437 = vmul.f32 %v298, %v434
      %v438 = vmul.f32 %v299, %v434
      %442 = vrot.lane.b32.xlu0 %v436, 80
      %v443 = vpop.permute.xlu0 %442
      %444 = vrot.lane.b32.xlu0 %v437, 80
      %v445 = vpop.permute.xlu0 %444
      %446 = vrot.lane.b32.xlu0 %v438, 80
      %v447 = vpop.permute.xlu0 %446
      %v448 = vsel %vm316, %v443, %v445
      %v449 = vsel %vm316, %v445, %v447
      %v453 = vadd.f32 %v429, %v443
      %v454 = vadd.f32 %v430, %v448
      %v455 = vadd.f32 %v431, %v449
      %456 = vset.pattern.permute.xlu0 21
      %457 = vperm.xlu0 %456, %v205
      %v458 = vpop.permute.xlu0 %457
      %v460 = vmul.f32 %v297, %v458
      %v461 = vmul.f32 %v298, %v458
      %v462 = vmul.f32 %v299, %v458
      %466 = vrot.lane.b32.xlu0 %v460, 64
      %v467 = vpop.permute.xlu0 %466
      %468 = vrot.lane.b32.xlu0 %v461, 64
      %v469 = vpop.permute.xlu0 %468
      %470 = vrot.lane.b32.xlu0 %v462, 64
      %v471 = vpop.permute.xlu0 %470
      %v472 = vsel %vm341, %v467, %v469
      %v473 = vsel %vm341, %v469, %v471
      %v477 = vadd.f32 %v453, %v467
      %v478 = vadd.f32 %v454, %v472
      %v479 = vadd.f32 %v455, %v473
      %vm480 = vcmp.ge.s32.totalorder %v231, 1
      %vm481 = vcmp.ge.s32.totalorder %v232, 1
      %v482 = vsel %vm480, 1, 0
      %v483 = vsel %vm481, 1, 0
      %vm484 = vcmp.eq.s32.totalorder %v482, 1
      %vm485 = vcmp.eq.s32.totalorder %v483, 1
      %489 = vrot.lane.b32.xlu0 %v477, 33
      %v490 = vpop.permute.xlu0 %489
      %491 = vrot.lane.b32.xlu0 %v478, 33
      %v492 = vpop.permute.xlu0 %491
      %493 = vrot.lane.b32.xlu0 %v479, 33
      %v494 = vpop.permute.xlu0 %493
      %vm495 = vcmask 269312
      %v496 = vsel %vm495, %v490, %v492
      %v497 = vsel %vm495, %v492, %v494
      %v500 = vsel %vm484, %v496, 0.0
      %v501 = vsel %vm485, %v497, 0.0
      %v502 = vadd.f32 %v372, %v500
      %v503 = vadd.f32 %v373, %v501
      %504 = vset.pattern.permute.xlu0 2
      %505 = vperm.xlu0 %504, %v205
      %v506 = vpop.permute.xlu0 %505
      %v508 = vmul.f32 %v233, %v506
      %v509 = vmul.f32 %v234, %v506
      %v510 = vmul.f32 %v235, %v506
      %v511 = vadd.f32 %v508, 0.0
      %v512 = vadd.f32 %v509, 0.0
      %v513 = vadd.f32 %v510, 0.0
      %514 = vset.pattern.permute.xlu0 7
      %515 = vperm.xlu0 %514, %v205
      %v516 = vpop.permute.xlu0 %515
      %v518 = vmul.f32 %v233, %v516
      %v519 = vmul.f32 %v234, %v516
      %v520 = vmul.f32 %v235, %v516
      %524 = vrot.lane.b32.xlu0 %v518, 112
      %v525 = vpop.permute.xlu0 %524
      %526 = vrot.lane.b32.xlu0 %v519, 112
      %v527 = vpop.permute.xlu0 %526
      %528 = vrot.lane.b32.xlu0 %v520, 112
      %v529 = vpop.permute.xlu0 %528
      %v530 = vsel %vm263, %v525, %v527
      %v531 = vsel %vm263, %v527, %v529
      %v535 = vadd.f32 %v511, %v530
      %v536 = vadd.f32 %v512, %v531
      %v537 = vadd.f32 %v513, %v529
      %538 = vset.pattern.permute.xlu0 12
      %539 = vperm.xlu0 %538, %v205
      %v540 = vpop.permute.xlu0 %539
      %v542 = vmul.f32 %v234, %v540
      %v543 = vmul.f32 %v235, %v540
      %546 = vrot.lane.b32.xlu0 %v542, 96
      %v547 = vpop.permute.xlu0 %546
      %548 = vrot.lane.b32.xlu0 %v543, 96
      %v549 = vpop.permute.xlu0 %548
      %v550 = vsel %vm288, %v547, %v549
      %v554 = vadd.f32 %v535, %v547
      %v555 = vadd.f32 %v536, %v550
      %v556 = vadd.f32 %v537, %v549
      %557 = vset.pattern.permute.xlu0 17
      %558 = vperm.xlu0 %557, %v205
      %v559 = vpop.permute.xlu0 %558
      %v561 = vmul.f32 %v297, %v559
      %v562 = vmul.f32 %v298, %v559
      %v563 = vmul.f32 %v299, %v559
      %567 = vrot.lane.b32.xlu0 %v561, 80
      %v568 = vpop.permute.xlu0 %567
      %569 = vrot.lane.b32.xlu0 %v562, 80
      %v570 = vpop.permute.xlu0 %569
      %571 = vrot.lane.b32.xlu0 %v563, 80
      %v572 = vpop.permute.xlu0 %571
      %v573 = vsel %vm316, %v568, %v570
      %v574 = vsel %vm316, %v570, %v572
      %v578 = vadd.f32 %v554, %v568
      %v579 = vadd.f32 %v555, %v573
      %v580 = vadd.f32 %v556, %v574
      %581 = vset.pattern.permute.xlu0 22
      %582 = vperm.xlu0 %581, %v205
      %v583 = vpop.permute.xlu0 %582
      %v585 = vmul.f32 %v297, %v583
      %v586 = vmul.f32 %v298, %v583
      %v587 = vmul.f32 %v299, %v583
      %591 = vrot.lane.b32.xlu0 %v585, 64
      %v592 = vpop.permute.xlu0 %591
      %593 = vrot.lane.b32.xlu0 %v586, 64
      %v594 = vpop.permute.xlu0 %593
      %595 = vrot.lane.b32.xlu0 %v587, 64
      %v596 = vpop.permute.xlu0 %595
      %v597 = vsel %vm341, %v592, %v594
      %v598 = vsel %vm341, %v594, %v596
      %v602 = vadd.f32 %v578, %v592
      %v603 = vadd.f32 %v579, %v597
      %v604 = vadd.f32 %v580, %v598
      %608 = vrot.lane.b32.xlu0 %v602, 32
      %v609 = vpop.permute.xlu0 %608
      %610 = vrot.lane.b32.xlu0 %v603, 32
      %v611 = vpop.permute.xlu0 %610
      %612 = vrot.lane.b32.xlu0 %v604, 32
      %v613 = vpop.permute.xlu0 %612
      %vm614 = vcmask 261120
      %v615 = vsel %vm614, %v609, %v611
      %v616 = vsel %vm614, %v611, %v613
      %v619 = vadd.f32 %v502, %v615
      %v620 = vadd.f32 %v503, %v616
      %621 = vset.pattern.permute.xlu0 3
      %622 = vperm.xlu0 %621, %v205
      %v623 = vpop.permute.xlu0 %622
      %v625 = vmul.f32 %v233, %v623
      %v626 = vmul.f32 %v234, %v623
      %v627 = vmul.f32 %v235, %v623
      %v628 = vadd.f32 %v625, 0.0
      %v629 = vadd.f32 %v626, 0.0
      %v630 = vadd.f32 %v627, 0.0
      %631 = vset.pattern.permute.xlu0 8
      %632 = vperm.xlu0 %631, %v205
      %v633 = vpop.permute.xlu0 %632
      %v635 = vmul.f32 %v233, %v633
      %v636 = vmul.f32 %v234, %v633
      %v637 = vmul.f32 %v235, %v633
      %641 = vrot.lane.b32.xlu0 %v635, 112
      %v642 = vpop.permute.xlu0 %641
      %643 = vrot.lane.b32.xlu0 %v636, 112
      %v644 = vpop.permute.xlu0 %643
      %645 = vrot.lane.b32.xlu0 %v637, 112
      %v646 = vpop.permute.xlu0 %645
      %v647 = vsel %vm263, %v642, %v644
      %v648 = vsel %vm263, %v644, %v646
      %v652 = vadd.f32 %v628, %v647
      %v653 = vadd.f32 %v629, %v648
      %v654 = vadd.f32 %v630, %v646
      %655 = vset.pattern.permute.xlu0 13
      %656 = vperm.xlu0 %655, %v205
      %v657 = vpop.permute.xlu0 %656
      %v659 = vmul.f32 %v297, %v657
      %v660 = vmul.f32 %v298, %v657
      %v661 = vmul.f32 %v299, %v657
      %665 = vrot.lane.b32.xlu0 %v659, 96
      %v666 = vpop.permute.xlu0 %665
      %667 = vrot.lane.b32.xlu0 %v660, 96
      %v668 = vpop.permute.xlu0 %667
      %669 = vrot.lane.b32.xlu0 %v661, 96
      %v670 = vpop.permute.xlu0 %669
      %v671 = vsel %vm288, %v666, %v668
      %v672 = vsel %vm288, %v668, %v670
      %v676 = vadd.f32 %v652, %v666
      %v677 = vadd.f32 %v653, %v671
      %v678 = vadd.f32 %v654, %v672
      %679 = vset.pattern.permute.xlu0 18
      %680 = vperm.xlu0 %679, %v205
      %v681 = vpop.permute.xlu0 %680
      %v683 = vmul.f32 %v297, %v681
      %v684 = vmul.f32 %v298, %v681
      %v685 = vmul.f32 %v299, %v681
      %689 = vrot.lane.b32.xlu0 %v683, 80
      %v690 = vpop.permute.xlu0 %689
      %691 = vrot.lane.b32.xlu0 %v684, 80
      %v692 = vpop.permute.xlu0 %691
      %693 = vrot.lane.b32.xlu0 %v685, 80
      %v694 = vpop.permute.xlu0 %693
      %v695 = vsel %vm316, %v690, %v692
      %v696 = vsel %vm316, %v692, %v694
      %v700 = vadd.f32 %v676, %v690
      %v701 = vadd.f32 %v677, %v695
      %v702 = vadd.f32 %v678, %v696
      %703 = vset.pattern.permute.xlu0 23
      %704 = vperm.xlu0 %703, %v205
      %v705 = vpop.permute.xlu0 %704
      %v707 = vmul.f32 %v297, %v705
      %v708 = vmul.f32 %v298, %v705
      %v709 = vmul.f32 %v299, %v705
      %713 = vrot.lane.b32.xlu0 %v707, 64
      %v714 = vpop.permute.xlu0 %713
      %715 = vrot.lane.b32.xlu0 %v708, 64
      %v716 = vpop.permute.xlu0 %715
      %717 = vrot.lane.b32.xlu0 %v709, 64
      %v718 = vpop.permute.xlu0 %717
      %v719 = vsel %vm341, %v714, %v716
      %v720 = vsel %vm341, %v716, %v718
      %v724 = vadd.f32 %v700, %v714
      %v725 = vadd.f32 %v701, %v719
      %v726 = vadd.f32 %v702, %v720
      %vm727 = vcmp.lt.s32.totalorder %v231, 15
      %vm728 = vcmp.lt.s32.totalorder %v232, 15
      %v729 = vsel %vm727, 1, 0
      %v730 = vsel %vm728, 1, 0
      %vm731 = vcmp.eq.s32.totalorder %v729, 1
      %vm732 = vcmp.eq.s32.totalorder %v730, 1
      %736 = vrot.lane.b32.xlu0 %v724, 31
      %v737 = vpop.permute.xlu0 %736
      %738 = vrot.lane.b32.xlu0 %v725, 31
      %v739 = vpop.permute.xlu0 %738
      %740 = vrot.lane.b32.xlu0 %v726, 31
      %v741 = vpop.permute.xlu0 %740
      %vm742 = vcmask 252928
      %v743 = vsel %vm742, %v737, %v739
      %v744 = vsel %vm742, %v739, %v741
      %v747 = vsel %vm731, %v743, 0.0
      %v748 = vsel %vm732, %v744, 0.0
      %v749 = vadd.f32 %v619, %v747
      %v750 = vadd.f32 %v620, %v748
      %751 = vset.pattern.permute.xlu0 4
      %752 = vperm.xlu0 %751, %v205
      %v753 = vpop.permute.xlu0 %752
      %v755 = vmul.f32 %v233, %v753
      %v756 = vmul.f32 %v234, %v753
      %v757 = vmul.f32 %v235, %v753
      %v758 = vadd.f32 %v755, 0.0
      %v759 = vadd.f32 %v756, 0.0
      %v760 = vadd.f32 %v757, 0.0
      %761 = vset.pattern.permute.xlu0 9
      %762 = vperm.xlu0 %761, %v205
      %v763 = vpop.permute.xlu0 %762
      %v765 = vmul.f32 %v233, %v763
      %v766 = vmul.f32 %v234, %v763
      %v767 = vmul.f32 %v235, %v763
      %771 = vrot.lane.b32.xlu0 %v765, 112
      %v772 = vpop.permute.xlu0 %771
      %773 = vrot.lane.b32.xlu0 %v766, 112
      %v774 = vpop.permute.xlu0 %773
      %775 = vrot.lane.b32.xlu0 %v767, 112
      %v776 = vpop.permute.xlu0 %775
      %v777 = vsel %vm263, %v772, %v774
      %v778 = vsel %vm263, %v774, %v776
      %v782 = vadd.f32 %v758, %v777
      %v783 = vadd.f32 %v759, %v778
      %v784 = vadd.f32 %v760, %v776
      %785 = vset.pattern.permute.xlu0 14
      %786 = vperm.xlu0 %785, %v205
      %v787 = vpop.permute.xlu0 %786
      %v789 = vmul.f32 %v297, %v787
      %v790 = vmul.f32 %v298, %v787
      %v791 = vmul.f32 %v299, %v787
      %795 = vrot.lane.b32.xlu0 %v789, 96
      %v796 = vpop.permute.xlu0 %795
      %797 = vrot.lane.b32.xlu0 %v790, 96
      %v798 = vpop.permute.xlu0 %797
      %799 = vrot.lane.b32.xlu0 %v791, 96
      %v800 = vpop.permute.xlu0 %799
      %v801 = vsel %vm288, %v796, %v798
      %v802 = vsel %vm288, %v798, %v800
      %v806 = vadd.f32 %v782, %v796
      %v807 = vadd.f32 %v783, %v801
      %v808 = vadd.f32 %v784, %v802
      %809 = vset.pattern.permute.xlu0 19
      %810 = vperm.xlu0 %809, %v205
      %v811 = vpop.permute.xlu0 %810
      %v813 = vmul.f32 %v297, %v811
      %v814 = vmul.f32 %v298, %v811
      %v815 = vmul.f32 %v299, %v811
      %819 = vrot.lane.b32.xlu0 %v813, 80
      %v820 = vpop.permute.xlu0 %819
      %821 = vrot.lane.b32.xlu0 %v814, 80
      %v822 = vpop.permute.xlu0 %821
      %823 = vrot.lane.b32.xlu0 %v815, 80
      %v824 = vpop.permute.xlu0 %823
      %v825 = vsel %vm316, %v820, %v822
      %v826 = vsel %vm316, %v822, %v824
      %v830 = vadd.f32 %v806, %v820
      %v831 = vadd.f32 %v807, %v825
      %v832 = vadd.f32 %v808, %v826
      %833 = vset.pattern.permute.xlu0 24
      %834 = vperm.xlu0 %833, %v205
      %v835 = vpop.permute.xlu0 %834
      %v837 = vmul.f32 %v297, %v835
      %v838 = vmul.f32 %v298, %v835
      %v839 = vmul.f32 %v299, %v835
      %843 = vrot.lane.b32.xlu0 %v837, 64
      %v844 = vpop.permute.xlu0 %843
      %845 = vrot.lane.b32.xlu0 %v838, 64
      %v846 = vpop.permute.xlu0 %845
      %847 = vrot.lane.b32.xlu0 %v839, 64
      %v848 = vpop.permute.xlu0 %847
      %v849 = vsel %vm341, %v844, %v846
      %v850 = vsel %vm341, %v846, %v848
      %v854 = vadd.f32 %v830, %v844
      %v855 = vadd.f32 %v831, %v849
      %v856 = vadd.f32 %v832, %v850
      %vm857 = vcmp.lt.s32.totalorder %v231, 14
      %vm858 = vcmp.lt.s32.totalorder %v232, 14
      %v859 = vsel %vm857, 1, 0
      %v860 = vsel %vm858, 1, 0
      %vm861 = vcmp.eq.s32.totalorder %v859, 1
      %vm862 = vcmp.eq.s32.totalorder %v860, 1
      %866 = vrot.lane.b32.xlu0 %v854, 30
      %v867 = vpop.permute.xlu0 %866
      %868 = vrot.lane.b32.xlu0 %v855, 30
      %v869 = vpop.permute.xlu0 %868
      %870 = vrot.lane.b32.xlu0 %v856, 30
      %v871 = vpop.permute.xlu0 %870
      %vm872 = vcmask 244736
      %v873 = vsel %vm872, %v867, %v869
      %v874 = vsel %vm872, %v869, %v871
      %v877 = vsel %vm861, %v873, 0.0
      %v878 = vsel %vm862, %v874, 0.0
      %v879 = vadd.f32 %v749, %v877
      %v880 = vadd.f32 %v750, %v878
      %881 = vst [vmem:[%s196] sm:$0xff] %v879
      %882 = vst [vmem:[%s196 + $0x8] sm:$0xff] %v880
      %p883 = scmp.lt.s32.totalorder %s17, 1
      %s884 = scalar_select %p883, %s17, 1
      %p885 = scmp.lt.s32.totalorder %s18, 5
      %s886 = scalar_select %p885, %s18, 5
      %s887 = smul.addr %s886, 2
      %s888 = smul.addr %s884, 12
      %s889 = sadd.s32 %s887, %s888
      %s890 = smul.addr %s889, 8
      %s891 = scalar_lea.vmem %s2, %s890
      // Predicated region
      $region29: #{omnishift_forward.1} parent=27 // pred_check
        %p892 = pneg %p99
      $region30: #{omnishift_forward.1} parent=27 // pred_check_branch
        %894 = sbr.rel (%p892) target = $region32
      $region31: #{omnishift_forward.1} parent=27 // pred_region
        _
      $region32: #{omnishift_forward.1} parent=27 // pred_fallthru
        _
    $region28: #{omnishift_forward.1} parent=5 // pred_fallthru
      _
    %p895 = scmp.le.s32.totalorder 2, %s8
    // Predicated region
    $region33: #{omnishift_forward.1} parent=5 // pred_check
      %p896 = pneg %p895
    $region34: #{omnishift_forward.1} parent=5 // pred_check_branch
      %898 = sbr.rel (%p896) target = $region36
    $region35: #{omnishift_forward.1} parent=5 // pred_region
      %s899 = ssub.s32 %s8, 2
      // Predicated region
      $region37: #{omnishift_forward.1} parent=35 // pred_check
        %p900 = pneg %p105
      $region38: #{omnishift_forward.1} parent=35 // pred_check_branch
        %902 = sbr.rel (%p900) target = $region40
      $region39: #{omnishift_forward.1} parent=35 // pred_region
        %p903 = scmp.lt.s32.totalorder %s19, 1
        %s904 = scalar_select %p903, %s19, 1
        %p905 = scmp.lt.s32.totalorder %s20, 5
        %s906 = scalar_select %p905, %s20, 5
        %s907 = smul.addr %s906, 2
        %s908 = smul.addr %s904, 12
        %s909 = sadd.s32 %s907, %s908
        %s910 = smul.addr %s909, 8
        %s911 = scalar_lea.vmem %s2, %s910
      $region40: #{omnishift_forward.1} parent=35 // pred_fallthru
        _
    $region36: #{omnishift_forward.1} parent=5 // pred_fallthru
      _
  $region6: #{omnishift_forward.1} parent=0 // loop_footer
    %s12 = sadd.s32 1, %s8
  $region7: #{omnishift_forward.1} parent=0 // loop_footer_branch
    %7 = sbr.rel target = $region3
  $region8: #{omnishift_forward.1} parent=0 // loop_exit
    _

</llo_original>
